<compile_context>
chip_gen: v5e
topology: v5e:2x2
jax: 0.10.0
libtpu: 0.0.40
codegen_flags: <defaults>
</compile_context>

<pallas_src>
import functools

import jax
import jax.numpy as jnp
import numpy as np
from jax import lax
from jax.experimental import pallas as pl
from jax.experimental.pallas import tpu as pltpu

EPS = 1e-5  # nn.LayerNorm default eps

# nn.GELU default is exact erf; the tanh approximation routes the transcendental to
# the EUP slot (free alongside MXU/VALU) per the perf review.  Set False for exact
# nn.GELU semantics.
GELU_APPROX = True


def _round_up(x, m):
    return (x + m - 1) // m * m


def _layernorm(x, w, b):
    mu = jnp.mean(x, axis=-1, keepdims=True)
    var = jnp.mean(jnp.square(x - mu), axis=-1, keepdims=True)
    return (x - mu) * lax.rsqrt(var + EPS) * w + b


def _vmem_capacity_bytes():
    try:
        info = pltpu.get_tpu_info()
        cap = getattr(info, "vmem_capacity_bytes", None)
        if cap:
            return int(cap)
    except Exception:
        pass
    return 128 * 2 ** 20


def _vmem_estimate(bt, Sp, D, mlp, n_head, out_dim):
    """Rough VMEM footprint (bytes) of the fused transformer kernel at batch block bt."""
    Nt = bt * Sp
    per_layer_w = 2 * 2 * (D * 3 * D + D * D + 2 * D * mlp)        # 2x-buffered bf16 weights
    per_layer_s = 2 * 4 * (3 * D + D + mlp + D + 4 * D)            # 2x-buffered f32 biases + LN
    tok_blk = 2 * Nt * D * 2                                       # 2x-buffered bf16 token block
    resident = Nt * D * 4 + Sp * D * 4                             # residual scratch + pos
    f32_tmp = 4 * (Nt * 3 * D + Nt * mlp + 3 * Nt * D)             # qkv, MLP hidden, misc temporaries
    f32_tmp += 4 * 2 * n_head * Sp * Sp                            # attention scores / probs
    head = 2 * 2 * D * out_dim + 4 * 2 * bt * out_dim + 4 * 8 * D  # proj + pooled + ln params
    internal = 4 * 2 ** 20                                         # Mosaic internal scratch margin
    return per_layer_w + per_layer_s + tok_blk + resident + f32_tmp + head + internal


# ----------------------------- Pallas kernels -----------------------------

def _patch_embed_kernel(x_ref, w_ref, o_ref):
    # (tm, Pp) @ (Pp, D): bf16 MXU operands, f32 accumulation, bf16 output.
    o_ref[...] = jnp.dot(x_ref[...].astype(jnp.bfloat16), w_ref[...],
                         preferred_element_type=jnp.float32).astype(o_ref.dtype)


def _vit_kernel(tok_ref, pos_ref, lnpre_w, lnpre_b,
                ln1_w, ln1_b, w_qkv, b_qkv, w_out, b_out,
                ln2_w, ln2_b, w_fc, b_fc, w_pr, b_pr,
                lnpost_w, lnpost_b, proj_ref,
                pooled_ref,
                x_vmem,
                *, n_head, seq_len, block_b):
    """One (batch-block, layer) grid step of the fused ViT transformer.

    grid = (B/Bt, L).  The residual stream of Bt images lives in `x_vmem` (VMEM
    scratch) across the whole layer axis; per-layer weights arrive as (1, ...)
    blocks of L-stacked arrays (auto-pipelined, default double-buffering) and are
    fetched from HBM once per Bt images.
    """
    l = pl.program_id(1)
    bf16 = jnp.bfloat16

    # --- layer-0 prologue: add positional embedding, ln_pre (fused glue) ---
    @pl.when(l == 0)
    def _():
        x0 = tok_ref[...].astype(jnp.float32) + pos_ref[...]
        x_vmem[...] = _layernorm(x0, lnpre_w[...], lnpre_b[...])

    Bt, Sp, D = x_vmem.shape
    Nt = Bt * Sp
    hd = D // n_head
    scale = hd ** -0.5

    x = x_vmem[...].reshape(Nt, D)                         # (Bt*Sp, D) f32 residual stream

    # ---------------- self-attention branch ----------------
    h = _layernorm(x, ln1_w[0], ln1_b[0])
    qkv = jnp.dot(h.astype(bf16), w_qkv[0],
                  preferred_element_type=jnp.float32) + b_qkv[0]      # (Nt, 3D) f32
    q_all = qkv[:, :D] * scale        # softmax scale folded into q (Nt*D muls, not H*Sp*Sp)
    k_all = qkv[:, D:2 * D]
    v_all = qkv[:, 2 * D:]

    kpos = lax.broadcasted_iota(jnp.int32, (1, 1, Sp), 2)
    outs = []
    for b in range(block_b):          # static unroll; weights reused from VMEM across images
        rows = slice(b * Sp, (b + 1) * Sp)
        # TODO(synk): pltpu.einshape could fuse these head split/merge relayouts; explicit
        # reshape/transpose kept for lowering robustness.
        qh = q_all[rows].reshape(Sp, n_head, hd).transpose(1, 0, 2)   # (H, Sp, hd)
        kh = k_all[rows].reshape(Sp, n_head, hd).transpose(1, 0, 2)
        vh = v_all[rows].reshape(Sp, n_head, hd).transpose(1, 0, 2)

        s = jnp.einsum("hqc,hkc->hqk", qh.astype(bf16), kh.astype(bf16),
                       preferred_element_type=jnp.float32)            # (H, Sp, Sp)
        s = jnp.where(kpos < seq_len, s, -1e30)    # mask padded key positions (Sp >= seq_len)
        s = s - jnp.max(s, axis=-1, keepdims=True)
        e = jnp.exp(s)
        p = e * pl.reciprocal(jnp.sum(e, axis=-1, keepdims=True), approx=True)
        o = jnp.einsum("hqk,hkc->hqc", p.astype(bf16), vh.astype(bf16),
                       preferred_element_type=jnp.float32)            # (H, Sp, hd)
        outs.append(o.transpose(1, 0, 2).reshape(Sp, D))
    attn = outs[0] if block_b == 1 else jnp.concatenate(outs, axis=0)  # (Nt, D)
    attn = jnp.dot(attn.astype(bf16), w_out[0],
                   preferred_element_type=jnp.float32) + b_out[0]
    x = x + attn

    # ---------------- MLP branch ----------------
    # TODO(synk): for production widths on v7x (64 MiB VMEM/TC), chunk w_fc/w_pr along the
    # mlp dim with an inner pipeline instead of holding whole (D,mlp)+(mlp,D) blocks.
    h2 = _layernorm(x, ln2_w[0], ln2_b[0])
    h2 = jnp.dot(h2.astype(bf16), w_fc[0],
                 preferred_element_type=jnp.float32) + b_fc[0]
    h2 = jax.nn.gelu(h2, approximate=GELU_APPROX)          # tanh approx -> EUP slot
    h2 = jnp.dot(h2.astype(bf16), w_pr[0],
                 preferred_element_type=jnp.float32) + b_pr[0]
    x = x + h2

    x3 = x.reshape(Bt, Sp, D)
    x_vmem[...] = x3

    # --- last-layer epilogue: CLS pooling + ln_post + projection for all Bt rows at once ---
    @pl.when(l == pl.num_programs(1) - 1)
    def _():
        cls = x3[:, 0, :]                                  # _global_pool -> CLS token, (Bt, D)
        pooled = _layernorm(cls, lnpost_w[...], lnpost_b[...])
        pooled_ref[0] = jnp.dot(pooled.astype(bf16), proj_ref[...],
                                preferred_element_type=jnp.float32)


# ----------------------------- pallas_call wrappers -----------------------------

def patch_embed(patches, w):
    """patches: (M, P) bf16, w: (P, D) bf16 -> (M, D) bf16 (== strided Conv2d, no bias)."""
    M, P = patches.shape
    D = w.shape[1]
    Pp = _round_up(P, 128)                         # lane-aligned contraction dim
    tm = 512 if M >= 512 else _round_up(M, 8)      # big row tiles: HBM-bound stage
    Mp = _round_up(M, tm)
    xp = jnp.pad(patches, ((0, Mp - M), (0, Pp - P)))
    wp = jnp.pad(w, ((0, Pp - P), (0, 0)))

    out = pl.pallas_call(
        _patch_embed_kernel,
        grid=(Mp // tm,),
        in_specs=[pl.BlockSpec((tm, Pp), lambda i: (i, 0)),
                  pl.BlockSpec((Pp, D), lambda i: (0, 0))],
        out_specs=pl.BlockSpec((tm, D), lambda i: (i, 0)),
        out_shape=jax.ShapeDtypeStruct((Mp, D), jnp.bfloat16),
        compiler_params=pltpu.CompilerParams(dimension_semantics=("parallel",)),
    )(xp, wp)
    return out[:M]


def transformer_forward(tokens, pos, params, cfg, seq_len):
    """tokens: (B, Sp, D) bf16 (zero-padded rows), pos: (Sp, D) f32 -> (B, out_dim) f32."""
    B, Sp, D = tokens.shape
    L = cfg["layers"]
    n_head = cfg["heads"]
    out_dim = cfg["output_dim"]
    mlp = params["w_fc"].shape[-1]

    # ---- chip-aware batch blocking + VMEM budget ----
    cap = _vmem_capacity_bytes()
    budget = int(0.75 * cap)                        # headroom for Mosaic internals / buffers
    bt_target = 2 if cap <= 72 * 2 ** 20 else 4     # v7x-class (64 MiB/TC) -> 2, v5e/v6e -> 4
    Bt = max(1, min(bt_target, B))
    while Bt > 1 and _vmem_estimate(Bt, Sp, D, mlp, n_head, out_dim) > budget:
        Bt = max(1, Bt // 2)
    Bp = _round_up(B, Bt)
    if Bp != B:
        tokens = jnp.pad(tokens, ((0, Bp - B), (0, 0), (0, 0)))
    nb = Bp // Bt

    est = _vmem_estimate(Bt, Sp, D, mlp, n_head, out_dim)
    vmem_limit = int(min(budget, max(32 * 2 ** 20, int(1.25 * est))))

    def full_spec(a):
        return pl.BlockSpec(a.shape, lambda b, l: (0,) * a.ndim)

    def layer_spec(a):
        # Default double-buffering keeps weight DMA hidden; batch blocking amortizes each
        # weight fetch over Bt images.
        return pl.BlockSpec((1,) + a.shape[1:],
                            lambda b, l: (l,) + (0,) * (a.ndim - 1))

    in_specs = [pl.BlockSpec((Bt, Sp, D), lambda b, l: (b, 0, 0)),   # tokens (resident over l)
                full_spec(pos),
                full_spec(params["ln_pre_w"]), full_spec(params["ln_pre_b"])]
    in_specs += [layer_spec(params[k]) for k in
                 ("ln1_w", "ln1_b", "w_qkv", "b_qkv", "w_out", "b_out",
                  "ln2_w", "ln2_b", "w_fc", "b_fc", "w_pr", "b_pr")]
    in_specs += [full_spec(params["ln_post_w"]), full_spec(params["ln_post_b"]),
                 full_spec(params["proj"])]

    args = (tokens, pos,
            params["ln_pre_w"], params["ln_pre_b"],
            params["ln1_w"], params["ln1_b"],
            params["w_qkv"], params["b_qkv"],
            params["w_out"], params["b_out"],
            params["ln2_w"], params["ln2_b"],
            params["w_fc"], params["b_fc"],
            params["w_pr"], params["b_pr"],
            params["ln_post_w"], params["ln_post_b"],
            params["proj"])

    pooled = pl.pallas_call(
        functools.partial(_vit_kernel, n_head=n_head, seq_len=seq_len, block_b=Bt),
        grid=(nb, L),
        in_specs=in_specs,
        out_specs=pl.BlockSpec((1, Bt, out_dim), lambda b, l: (b, 0, 0)),
        out_shape=jax.ShapeDtypeStruct((nb, Bt, out_dim), jnp.float32),
        scratch_shapes=[pltpu.VMEM((Bt, Sp, D), jnp.float32)],
        compiler_params=pltpu.CompilerParams(
            dimension_semantics=("parallel", "arbitrary"),
            vmem_limit_bytes=vmem_limit),
    )(*args)
    return pooled.reshape(Bp, out_dim)[:B]


# ----------------------------- full forward -----------------------------

def vit_forward(x_img, params, cfg):
    B, C, H, W = x_img.shape
    ph = pw = cfg["patch_size"]
    gh, gw = H // ph, W // pw
    D = cfg["width"]
    assert D % cfg["heads"] == 0, "d_model must be divisible by n_head"
    S = gh * gw + 1
    Sp = _round_up(S, 8)     # sublane-aligned sequence; padded keys masked in-kernel
    P = C * ph * pw

    # im2col (JAX glue): (B, C, H, W) -> (B*N, C*ph*pw), channel-major within each patch
    # to match Conv2d weight layout (D, C, ph, pw).  bf16 halves this stage's HBM traffic.
    xp = x_img.reshape(B, C, gh, ph, gw, pw)
    xp = xp.transpose(0, 2, 4, 1, 3, 5).reshape(B * gh * gw, P).astype(jnp.bfloat16)

    emb = patch_embed(xp, params["conv1_w"]).reshape(B, gh * gw, D)   # Conv2d, stride=patch

    cls = jnp.broadcast_to(params["class_embedding"].astype(jnp.bfloat16)[None, None, :],
                           (B, 1, D))
    tokens = jnp.concatenate([cls, emb], axis=1)                      # (B, S, D) bf16
    tokens = jnp.pad(tokens, ((0, 0), (0, Sp - S), (0, 0)))
    pos = jnp.pad(params["positional_embedding"], ((0, Sp - S), (0, 0)))

    return transformer_forward(tokens, pos, params, cfg, S)


# ------------------- plain-JAX reference (mirrors bf16 matmul casts, exact GELU) -------------------

def vit_reference(x_img, params, cfg):
    B, C, H, W = x_img.shape
    ph = pw = cfg["patch_size"]
    gh, gw = H // ph, W // pw
    D, nh = cfg["width"], cfg["heads"]
    hd = D // nh
    bf16, f32 = jnp.bfloat16, jnp.float32

    xp = x_img.reshape(B, C, gh, ph, gw, pw)
    xp = xp.transpose(0, 2, 4, 1, 3, 5).reshape(B, gh * gw, C * ph * pw)
    emb = jnp.einsum("bnp,pd->bnd", xp.astype(bf16), params["conv1_w"],
                     preferred_element_type=f32)
    cls = jnp.broadcast_to(params["class_embedding"][None, None, :], (B, 1, D))
    x = jnp.concatenate([cls.astype(f32), emb], axis=1) + params["positional_embedding"]
    x = _layernorm(x, params["ln_pre_w"], params["ln_pre_b"])

    S = x.shape[1]
    for l in range(cfg["layers"]):
        h = _layernorm(x, params["ln1_w"][l], params["ln1_b"][l])
        qkv = jnp.einsum("bsd,de->bse", h.astype(bf16), params["w_qkv"][l],
                         preferred_element_type=f32) + params["b_qkv"][l]
        q = qkv[..., :D].reshape(B, S, nh, hd).transpose(0, 2, 1, 3)
        k = qkv[..., D:2 * D].reshape(B, S, nh, hd).transpose(0, 2, 1, 3)
        v = qkv[..., 2 * D:].reshape(B, S, nh, hd).transpose(0, 2, 1, 3)
        s = jnp.einsum("bhqc,bhkc->bhqk", q.astype(bf16), k.astype(bf16),
                       preferred_element_type=f32) * hd ** -0.5
        s = s - jnp.max(s, axis=-1, keepdims=True)
        e = jnp.exp(s)
        p = e / jnp.sum(e, axis=-1, keepdims=True)
        o = jnp.einsum("bhqk,bhkc->bhqc", p.astype(bf16), v.astype(bf16),
                       preferred_element_type=f32)
        o = o.transpose(0, 2, 1, 3).reshape(B, S, D)
        x = x + (jnp.einsum("bsd,de->bse", o.astype(bf16), params["w_out"][l],
                            preferred_element_type=f32) + params["b_out"][l])
        h2 = _layernorm(x, params["ln2_w"][l], params["ln2_b"][l])
        h2 = jnp.einsum("bsd,dm->bsm", h2.astype(bf16), params["w_fc"][l],
                        preferred_element_type=f32) + params["b_fc"][l]
        h2 = jax.nn.gelu(h2, approximate=False)            # exact nn.GELU (module semantics)
        x = x + (jnp.einsum("bsm,md->bsd", h2.astype(bf16), params["w_pr"][l],
                            preferred_element_type=f32) + params["b_pr"][l])

    pooled = _layernorm(x[:, 0], params["ln_post_w"], params["ln_post_b"])
    return jnp.einsum("bd,de->be", pooled.astype(bf16), params["proj"],
                      preferred_element_type=f32)


# ----------------------------- deterministic parameter init -----------------------------

def init_params(key, cfg):
    D = cfg["width"]
    L = cfg["layers"]
    mlp = int(D * cfg["mlp_ratio"])
    gh = gw = cfg["image_size"] // cfg["patch_size"]
    S = gh * gw + 1
    P = 3 * cfg["patch_size"] ** 2
    scale = D ** -0.5

    keys = iter(jax.random.split(key, 16))
    f32 = lambda shape, s=0.02: (s * jax.random.normal(next(keys), shape)).astype(jnp.float32)
    b16 = lambda shape, s=0.02: (s * jax.random.normal(next(keys), shape)).astype(jnp.bfloat16)

    return {
        # conv1 weight pre-transposed to (C*ph*pw, D), rows ordered (c, i, j) to match
        # Conv2d weight (D, C, ph, pw).  Matmul weights stored bf16 (MXU).
        "conv1_w": b16((P, D)),
        "class_embedding": f32((D,), scale),
        "positional_embedding": f32((S, D), scale),
        "ln_pre_w": jnp.ones((1, D), jnp.float32),
        "ln_pre_b": jnp.zeros((1, D), jnp.float32),
        "ln_post_w": jnp.ones((1, D), jnp.float32),
        "ln_post_b": jnp.zeros((1, D), jnp.float32),
        "proj": b16((D, cfg["output_dim"]), scale),
        # per-layer weights stacked along a leading L axis (streamed by BlockSpec)
        "ln1_w": jnp.ones((L, 1, D), jnp.float32),
        "ln1_b": jnp.zeros((L, 1, D), jnp.float32),
        "w_qkv": b16((L, D, 3 * D)), "b_qkv": f32((L, 1, 3 * D)),
        "w_out": b16((L, D, D)),     "b_out": f32((L, 1, D)),
        "ln2_w": jnp.ones((L, 1, D), jnp.float32),
        "ln2_b": jnp.zeros((L, 1, D), jnp.float32),
        "w_fc": b16((L, D, mlp)),    "b_fc": f32((L, 1, mlp)),
        "w_pr": b16((L, mlp, D)),    "b_pr": f32((L, 1, D)),
    }


# ----------------------------- main -----------------------------

if __name__ == "__main__":
    cfg = dict(image_size=16, patch_size=4, width=32, layers=2, heads=4,
               mlp_ratio=4.0, output_dim=16)

    key = jax.random.PRNGKey(0)
    k_img, k_par = jax.random.split(key)
    x = jax.random.normal(k_img, (2, 3, cfg["image_size"], cfg["image_size"]), jnp.float32)
    params = init_params(k_par, cfg)

    out = jax.block_until_ready(vit_forward(x, params, cfg))
    ref = jax.block_until_ready(vit_reference(x, params, cfg))

    assert out.shape == (2, cfg["output_dim"]), out.shape
    np.testing.assert_allclose(np.asarray(out), np.asarray(ref), rtol=2e-2, atol=2e-2)

    print("KERNEL_OK")
</pallas_src>

<mosaic_0001>
module attributes {stable_mosaic.version = 11 : i64} {
  func.func @_patch_embed_kernel(%arg0: i32, %arg1: memref<32x128xbf16, #tpu.memory_space<vmem>>, %arg2: memref<128x32xbf16, #tpu.memory_space<vmem>>, %arg3: memref<32x32xbf16, #tpu.memory_space<vmem>>) attributes {dimension_semantics = [#tpu.dimension_semantics<parallel>], iteration_bounds = array<i64: 1>, scalar_prefetch = 0 : i64, scratch_operands = 0 : i64, tpu.core_type = #tpu.core_type<tc>, window_params = [{transform_indices = @transform_0, window_bounds = array<i64: 32, 128>}, {pipeline_mode = #tpu.pipeline_mode<synchronous>, transform_indices = @transform_1, window_bounds = array<i64: 128, 32>}, {transform_indices = @transform_2, window_bounds = array<i64: 32, 32>}]} {
    %c0 = arith.constant 0 : index
    %c0_0 = arith.constant 0 : index
    %0 = vector.load %arg1[%c0, %c0_0] : memref<32x128xbf16, #tpu.memory_space<vmem>>, vector<32x128xbf16>
    %c0_1 = arith.constant 0 : index
    %c0_2 = arith.constant 0 : index
    %1 = vector.load %arg2[%c0_1, %c0_2] : memref<128x32xbf16, #tpu.memory_space<vmem>>, vector<128x32xbf16>
    %cst = arith.constant dense<0.000000e+00> : vector<32x32xf32>
    %2 = tpu.matmul %0, %1, %cst {dimension_numbers = #tpu.dot_dimension_numbers<[1], [0], [0], [1], [0, 0, 1, 1], [], []>} : vector<32x128xbf16>, vector<128x32xbf16>, vector<32x32xf32> -> vector<32x32xf32>
    %3 = arith.truncf %2 : vector<32x32xf32> to vector<32x32xbf16>
    %c0_3 = arith.constant 0 : index
    %c0_4 = arith.constant 0 : index
    %4 = vector.load %arg3[%c0_3, %c0_4] : memref<32x32xbf16, #tpu.memory_space<vmem>>, vector<32x32xbf16>
    tpu.vector_store %arg3[%c0_3, %c0_4], %3 {strides = array<i32>} : memref<32x32xbf16, #tpu.memory_space<vmem>>, vector<32x32xbf16>,
    return
  }
  func.func @transform_0(%arg0: i32) -> (i32, i32) {
    %c0_i32 = arith.constant 0 : i32
    %c0_i32_0 = arith.constant 0 : i32
    return %arg0, %c0_i32 : i32, i32
  }
  func.func @transform_1(%arg0: i32) -> (i32, i32) {
    %c0_i32 = arith.constant 0 : i32
    %c0_i32_0 = arith.constant 0 : i32
    %c0_i32_1 = arith.constant 0 : i32
    return %c0_i32, %c0_i32_0 : i32, i32
  }
  func.func @transform_2(%arg0: i32) -> (i32, i32) {
    %c0_i32 = arith.constant 0 : i32
    %c0_i32_0 = arith.constant 0 : i32
    return %arg0, %c0_i32 : i32, i32
  }
}

</mosaic_0001>

<llo_original>
// kernel: tpu_custom_call.1
$region0: #{tpu_custom_call.1}
  #allocation0 [shape = 'u32[]', space=smem, size = 0x4, offset = 0x4, fixed_abs, tag = 'smem constant byte address 0x4 - core index']
  #allocation1 [shape = 'u32[72,128]{1,0:T(1,128)}', space=vmem, size = 0x9000, scoped, tag = 'internal scratch']
  %s0 = inlined_call_operand.vmem [shape: bf16[32,128], index: 0, kind: input, shape index: {}]
  %s1 = inlined_call_operand.vmem [shape: bf16[128,32], index: 1, kind: input, shape index: {}]
  %s2 = inlined_call_operand.hbm [shape: bf16[32,32], index: 2, kind: output, shape index: {}]
  %s3 = sld [smem:[#allocation0]]
  $region18: #{tpu_custom_call.1} parent=0
    _
  %s5 = ssub.s32 1, %s3
  %s6 = scalar_select 0, %s5, %s3
  $region1: #{tpu_custom_call.1} parent=0
    #allocation2 [shape = 'u8[8192]{0}', space=vmem, size = 0x2000, scoped, tag = 'output window, operand 0, single buffered']
    #allocation3 [shape = 's32[1]{0}', space=sflag, size = 0x4, scoped, tag = 'scoped memory for tpu_custom_call.1']
    %7 = vsyncpa [#allocation3], 0
    // Predicated region
    $region2: #{tpu_custom_call.1} parent=1 // pred_check
      _
    $region3: #{tpu_custom_call.1} parent=1 // pred_check_branch
      %9 = sbr.rel (0) target = $region5
    $region4: #{tpu_custom_call.1} parent=1 // pred_region
      _
    $region5: #{tpu_custom_call.1} parent=1 // pred_fallthru
      _
    // Predicated region
    $region6: #{tpu_custom_call.1} parent=1 // pred_check
      _
    $region7: #{tpu_custom_call.1} parent=1 // pred_check_branch
      %11 = sbr.rel (0) target = $region9
    $region8: #{tpu_custom_call.1} parent=1 // pred_region
      _
    $region9: #{tpu_custom_call.1} parent=1 // pred_fallthru
      _
    %v12 = vld [vmem:[%s0] sm:$0xf]
    %v13 = vld [vmem:[%s0 + $0x4] sm:$0xf]
    %v14 = vld [vmem:[%s0 + $0x8] sm:$0xf]
    %v15 = vld [vmem:[%s0 + $0xc] sm:$0xf]
    %v16 = vld [vmem:[%s1] sm:$0xf]
    %v17 = vld [vmem:[%s1 + $0x4] sm:$0xf]
    %v18 = vld [vmem:[%s1 + $0x8] sm:$0xf]
    %v19 = vld [vmem:[%s1 + $0xc] sm:$0xf]
    %v20 = vld [vmem:[%s1 + $0x10] sm:$0xf]
    %v21 = vld [vmem:[%s1 + $0x14] sm:$0xf]
    %v22 = vld [vmem:[%s1 + $0x18] sm:$0xf]
    %v23 = vld [vmem:[%s1 + $0x1c] sm:$0xf]
    %v24 = vld [vmem:[%s1 + $0x20] sm:$0xf]
    %v25 = vld [vmem:[%s1 + $0x24] sm:$0xf]
    %v26 = vld [vmem:[%s1 + $0x28] sm:$0xf]
    %v27 = vld [vmem:[%s1 + $0x2c] sm:$0xf]
    %v28 = vld [vmem:[%s1 + $0x30] sm:$0xf]
    %v29 = vld [vmem:[%s1 + $0x34] sm:$0xf]
    %v30 = vld [vmem:[%s1 + $0x38] sm:$0xf]
    %v31 = vld [vmem:[%s1 + $0x3c] sm:$0xf]
    %v36 = vunpack.c.l.b16 %v12
    %v37 = vunpack.c.l.b16 %v13
    %v38 = vunpack.c.l.b16 %v14
    %v39 = vunpack.c.l.b16 %v15
    %v40 = vpack.c.b16 %v37, %v36
    %v41 = vpack.c.b16 %v39, %v38
    %v60 = vunpack.c.l.b16 %v16
    %v61 = vunpack.c.l.b16 %v17
    %v62 = vunpack.c.l.b16 %v18
    %v63 = vunpack.c.l.b16 %v19
    %v64 = vunpack.c.l.b16 %v20
    %v65 = vunpack.c.l.b16 %v21
    %v66 = vunpack.c.l.b16 %v22
    %v67 = vunpack.c.l.b16 %v23
    %v68 = vunpack.c.l.b16 %v24
    %v69 = vunpack.c.l.b16 %v25
    %v70 = vunpack.c.l.b16 %v26
    %v71 = vunpack.c.l.b16 %v27
    %v72 = vunpack.c.l.b16 %v28
    %v73 = vunpack.c.l.b16 %v29
    %v74 = vunpack.c.l.b16 %v30
    %v75 = vunpack.c.l.b16 %v31
    %v76 = vpack.c.b16 %v61, %v60
    %v77 = vpack.c.b16 %v63, %v62
    %v78 = vpack.c.b16 %v65, %v64
    %v79 = vpack.c.b16 %v67, %v66
    %v80 = vpack.c.b16 %v69, %v68
    %v81 = vpack.c.b16 %v71, %v70
    %v82 = vpack.c.b16 %v73, %v72
    %v83 = vpack.c.b16 %v75, %v74
    %92 = vmatpush.bf16.msra.mxu0 %v83
    %93 = vmatpush.bf16.msra.mxu0 %v82
    %94 = vmatpush.bf16.msra.mxu0 %v81
    %95 = vmatpush.bf16.msra.mxu0 %v80
    %96 = vmatpush.bf16.msra.mxu0 %v79
    %97 = vmatpush.bf16.msra.mxu0 %v78
    %98 = vmatpush.bf16.msra.mxu0 %v77
    %99 = vmatpush.bf16.msra.mxu0 %v76
    %100 = vmatmul.bf16.gmra.mxu0 %v40
    %v101 = vpop.f32.mrf.mxu0
    %v102 = vadd.f32 0.0, %v101
    %v103 = vpop.f32.mrf.mxu0
    %v104 = vadd.f32 0.0, %v103
    %105 = vmatmul.bf16.gmra.mxu0 %v41
    %v106 = vpop.f32.mrf.mxu0
    %v107 = vadd.f32 0.0, %v106
    %v108 = vpop.f32.mrf.mxu0
    %v109 = vadd.f32 0.0, %v108
    %110 = vdwg.mxu0
    %v111 = vpack.c.bf16 %v102, %v102
    %v112 = vpack.c.bf16 %v104, %v104
    %v113 = vpack.c.bf16 %v107, %v107
    %v114 = vpack.c.bf16 %v109, %v109
    %vm115 = vcmask 257024
    %116 = vst.msk [vmem:[#allocation2] sm:$0xf] %vm115, %v111
    %117 = vst.msk [vmem:[#allocation2 + $0x4] sm:$0xf] %vm115, %v112
    %118 = vst.msk [vmem:[#allocation2 + $0x8] sm:$0xf] %vm115, %v113
    %119 = vst.msk [vmem:[#allocation2 + $0xc] sm:$0xf] %vm115, %v114
    // Predicated region
    $region10: #{tpu_custom_call.1} parent=1 // pred_check
      _
    $region11: #{tpu_custom_call.1} parent=1 // pred_check_branch
      %121 = sbr.rel (0) target = $region13
    $region12: #{tpu_custom_call.1} parent=1 // pred_region
      %123 = vsyncadd [#allocation3], 0
      %s124 = sshll.u32 [#allocation2], 4
      %s125 = int_to_ptr.vmem [resolvable:$true] %s124
      %s126 = sshll.u32 %s2, 4
      %s127 = int_to_ptr.hbm [resolvable:$true] %s126
      %132 = dma.vmem_to_hbm [thread:$0]  %s125, 256, %s127, [#allocation3], 64, 64, 4
    $region13: #{tpu_custom_call.1} parent=1 // pred_fallthru
      _
    // Predicated region
    $region14: #{tpu_custom_call.1} parent=1 // pred_check
      _
    $region15: #{tpu_custom_call.1} parent=1 // pred_check_branch
      %134 = sbr.rel (0) target = $region17
    $region16: #{tpu_custom_call.1} parent=1 // pred_region
      %136 = dma.done [#allocation3], 256
    $region17: #{tpu_custom_call.1} parent=1 // pred_fallthru
      _
    %137 = vsyncpa [#allocation3], 1

</llo_original>
